<compile_context>
chip_gen: v5e
topology: v5e:2x2
jax: 0.10.0
libtpu: 0.0.40
codegen_flags: <defaults>
</compile_context>

<pallas_src>
import functools

import jax
import jax.numpy as jnp
from jax.experimental import pallas as pl
from jax.experimental.pallas import tpu as pltpu


def _round_up(n, m):
    return ((n + m - 1) // m) * m


def _mlp_kernel(x_ref, w_ref, b_ref, o_ref):
    # x_ref: (TM, TK) f32      w_ref: (TK, TN) bf16   (weight pre-transposed)
    # b_ref: (1, TN)  f32      o_ref: (TM, TN) f32 (doubles as f32 accumulator,
    #                                               resident across the K axis)
    k = pl.program_id(2)

    @pl.when(k == 0)
    def _():
        o_ref[...] = jnp.zeros_like(o_ref)

    # Canonical (M,K)x(K,N) MXU contraction with f32 accumulation.  The x tile
    # is cast to bf16 in-kernel (no extra HBM pass in the wrapper).
    o_ref[...] += jnp.dot(
        x_ref[...].astype(jnp.bfloat16),
        w_ref[...],
        preferred_element_type=jnp.float32,
    )

    @pl.when(k == pl.num_programs(2) - 1)
    def _():
        y = o_ref[...] + b_ref[...]                       # f32 bias add
        # sigmoid(y) = 1 / (1 + exp(-y)); exp and approx-reciprocal both land
        # on the EUP slot, keeping the epilogue off the VALU divide path.
        o_ref[...] = pl.reciprocal(1.0 + jnp.exp(-y), approx=True)


def prepare_params(w, b, *, tn=512, tk=1024):
    """One-time parameter prep (hoist off the per-call hot path).

    w: (O, D) in PyTorch nn.Linear layout, b: (O,).
    Returns:
      w_p: (Dp, Op) bf16 — transposed + zero-padded (zero padding on the
           reduction dim keeps the K accumulation exact).
      b_p: (1, Op)  f32.
    """
    O, D = w.shape
    Dp0 = _round_up(D, 128)
    Op0 = _round_up(O, 128)
    TK = min(tk, Dp0)
    TN = min(tn, Op0)
    Dp = _round_up(Dp0, TK)
    Op = _round_up(Op0, TN)
    w_p = jnp.pad(jnp.asarray(w, jnp.float32).T,
                  ((0, Dp - D), (0, Op - O))).astype(jnp.bfloat16)
    b_p = jnp.pad(jnp.asarray(b, jnp.float32), (0, Op - O)).reshape(1, Op)
    return w_p, b_p


@functools.partial(
    jax.jit,
    static_argnames=("out_dim", "tm", "tn", "tk", "vmem_limit_bytes"))
def mlp_forward(x, w_p, b_p, *, out_dim, tm=512, tn=512, tk=1024,
                vmem_limit_bytes=48 * 1024 * 1024):
    """x: (..., D) float; w_p/b_p from prepare_params.  Returns (..., out_dim) f32."""
    assert tm % 8 == 0 and tn % 128 == 0 and tk % 128 == 0, (
        "tm must be a multiple of 8, tn/tk multiples of 128")

    orig_lead = x.shape[:-1]
    D = x.shape[-1]
    x2 = jnp.asarray(x, jnp.float32).reshape(-1, D)
    B = x2.shape[0]
    Dp, Op = w_p.shape

    # Batch tiling: collapse the i axis to one block whenever the batch fits
    # (maximizes weight reuse — the weight is then streamed from HBM once).
    Bp0 = _round_up(B, 8)
    TM = min(tm, Bp0)
    Bp = _round_up(Bp0, TM)
    TK = min(tk, Dp)
    TN = min(tn, Op)
    assert Dp % TK == 0 and Op % TN == 0, (
        "w_p padding does not match tile sizes; use the same tn/tk in "
        "prepare_params and mlp_forward")

    # Pad x only when needed (fast path for already-aligned shapes).
    if (Bp, Dp) != (B, D):
        x2 = jnp.pad(x2, ((0, Bp - B), (0, Dp - D)))

    grid = (Bp // TM, Op // TN, Dp // TK)   # reduction (K) innermost

    out_p = pl.pallas_call(
        _mlp_kernel,
        out_shape=jax.ShapeDtypeStruct((Bp, Op), jnp.float32),
        grid_spec=pltpu.PrefetchScalarGridSpec(
            num_scalar_prefetch=0,
            grid=grid,
            in_specs=[
                pl.BlockSpec((TM, TK), lambda i, j, k: (i, k)),   # x (f32)
                pl.BlockSpec((TK, TN), lambda i, j, k: (k, j)),   # w (bf16, (D,O))
                pl.BlockSpec((1, TN), lambda i, j, k: (0, j)),    # bias (f32)
            ],
            out_specs=pl.BlockSpec((TM, TN), lambda i, j, k: (i, j)),
        ),
        compiler_params=pltpu.CompilerParams(
            dimension_semantics=("parallel", "parallel", "arbitrary"),
            vmem_limit_bytes=vmem_limit_bytes,
        ),
    )(x2, w_p, b_p)

    # Slice away padding only when there is any.
    if Bp == B and Op == out_dim:
        out = out_p
    else:
        out = out_p[:B, :out_dim]
    return out.reshape(orig_lead + (out_dim,))


def _reference(x, w, b):
    return jax.nn.sigmoid(x @ w.T + b)


if __name__ == "__main__":
    key = jax.random.PRNGKey(0)
    kx, kw, kb = jax.random.split(key, 3)

    batch, dim, out_dim = 8, 32, 16

    # Deterministic parameter init mimicking nn.Linear default:
    # U(-1/sqrt(dim), 1/sqrt(dim)) for both weight and bias.
    bound = 1.0 / (dim ** 0.5)
    w = jax.random.uniform(kw, (out_dim, dim), jnp.float32, -bound, bound)
    b = jax.random.uniform(kb, (out_dim,), jnp.float32, -bound, bound)
    x = jax.random.normal(kx, (batch, dim), jnp.float32)

    # One-time parameter prep (off the hot path), then the Pallas forward.
    w_p, b_p = prepare_params(w, b)
    out = mlp_forward(x, w_p, b_p, out_dim=out_dim)
    jax.block_until_ready(out)

    ref = _reference(x, w, b)
    assert out.shape == (batch, out_dim)
    # bf16 MXU inputs (f32 accumulation) + approx EUP reciprocal vs a pure-f32
    # reference: loosen tolerance; sigmoid outputs are in (0, 1).
    assert jnp.allclose(out, ref, atol=2e-2, rtol=2e-2), (
        float(jnp.max(jnp.abs(out - ref))))

    print("KERNEL_OK")
</pallas_src>

<mosaic_0001>
module attributes {stable_mosaic.version = 11 : i64} {
  func.func @_mlp_kernel(%arg0: i32, %arg1: i32, %arg2: i32, %arg3: memref<8x128xf32, #tpu.memory_space<vmem>>, %arg4: memref<128x128xbf16, #tpu.memory_space<vmem>>, %arg5: memref<1x128xf32, #tpu.memory_space<vmem>>, %arg6: memref<8x128xf32, #tpu.memory_space<vmem>>) attributes {dimension_semantics = [#tpu.dimension_semantics<parallel>, #tpu.dimension_semantics<parallel>, #tpu.dimension_semantics<arbitrary>], iteration_bounds = array<i64: 1, 1, 1>, scalar_prefetch = 0 : i64, scratch_operands = 0 : i64, tpu.core_type = #tpu.core_type<tc>, window_params = [{transform_indices = @transform_0, window_bounds = array<i64: 8, 128>}, {transform_indices = @transform_1, window_bounds = array<i64: 128, 128>}, {transform_indices = @transform_2, window_bounds = array<i64: 1, 128>}, {transform_indices = @transform_3, window_bounds = array<i64: 8, 128>}]} {
    %c0_i32 = arith.constant 0 : i32
    %0 = arith.cmpi eq, %arg2, %c0_i32 : i32
    %1 = arith.extui %0 : i1 to i32
    %c0_i32_0 = arith.constant 0 : i32
    %2 = arith.cmpi ne, %1, %c0_i32_0 : i32
    scf.if %2 {
      %cst_10 = arith.constant 0.000000e+00 : f32
      %13 = vector.broadcast %cst_10 : f32 to vector<8x128xf32>
      %c0_11 = arith.constant 0 : index
      %c0_12 = arith.constant 0 : index
      %14 = vector.load %arg6[%c0_11, %c0_12] : memref<8x128xf32, #tpu.memory_space<vmem>>, vector<8x128xf32>
      tpu.vector_store %arg6[%c0_11, %c0_12], %13 {strides = array<i32>} : memref<8x128xf32, #tpu.memory_space<vmem>>, vector<8x128xf32>,
    } else {
    }
    %c0 = arith.constant 0 : index
    %c0_1 = arith.constant 0 : index
    %3 = vector.load %arg6[%c0, %c0_1] : memref<8x128xf32, #tpu.memory_space<vmem>>, vector<8x128xf32>
    %c0_2 = arith.constant 0 : index
    %c0_3 = arith.constant 0 : index
    %4 = vector.load %arg3[%c0_2, %c0_3] : memref<8x128xf32, #tpu.memory_space<vmem>>, vector<8x128xf32>
    %5 = arith.truncf %4 : vector<8x128xf32> to vector<8x128xbf16>
    %c0_4 = arith.constant 0 : index
    %c0_5 = arith.constant 0 : index
    %6 = vector.load %arg4[%c0_4, %c0_5] : memref<128x128xbf16, #tpu.memory_space<vmem>>, vector<128x128xbf16>
    %cst = arith.constant dense<0.000000e+00> : vector<8x128xf32>
    %7 = tpu.matmul %5, %6, %cst {dimension_numbers = #tpu.dot_dimension_numbers<[1], [0], [0], [1], [0, 0, 1, 1], [], []>} : vector<8x128xbf16>, vector<128x128xbf16>, vector<8x128xf32> -> vector<8x128xf32>
    %8 = arith.addf %3, %7 : vector<8x128xf32>
    %c0_6 = arith.constant 0 : index
    %c0_7 = arith.constant 0 : index
    %9 = vector.load %arg6[%c0_6, %c0_7] : memref<8x128xf32, #tpu.memory_space<vmem>>, vector<8x128xf32>
    tpu.vector_store %arg6[%c0_6, %c0_7], %8 {strides = array<i32>} : memref<8x128xf32, #tpu.memory_space<vmem>>, vector<8x128xf32>,
    %c0_i32_8 = arith.constant 0 : i32
    %10 = arith.cmpi eq, %arg2, %c0_i32_8 : i32
    %11 = arith.extui %10 : i1 to i32
    %c0_i32_9 = arith.constant 0 : i32
    %12 = arith.cmpi ne, %11, %c0_i32_9 : i32
    scf.if %12 {
      %c0_10 = arith.constant 0 : index
      %c0_11 = arith.constant 0 : index
      %13 = vector.load %arg6[%c0_10, %c0_11] : memref<8x128xf32, #tpu.memory_space<vmem>>, vector<8x128xf32>
      %c0_12 = arith.constant 0 : index
      %c0_13 = arith.constant 0 : index
      %14 = vector.load %arg5[%c0_12, %c0_13] : memref<1x128xf32, #tpu.memory_space<vmem>>, vector<1x128xf32>
      %15 = vector.broadcast %14 : vector<1x128xf32> to vector<8x128xf32>
      %16 = arith.addf %13, %15 : vector<8x128xf32>
      %cst_14 = arith.constant 0.000000e+00 : f32
      %17 = vector.broadcast %cst_14 : f32 to vector<8x128xf32>
      %18 = arith.subf %17, %16 : vector<8x128xf32>
      %19 = math.exp %18 : vector<8x128xf32>
      %cst_15 = arith.constant 1.000000e+00 : f32
      %20 = vector.broadcast %cst_15 : f32 to vector<8x128xf32>
      %21 = arith.addf %20, %19 : vector<8x128xf32>
      %22 = tpu.reciprocal %21 {approx = true} : vector<8x128xf32> -> vector<8x128xf32>
      %c0_16 = arith.constant 0 : index
      %c0_17 = arith.constant 0 : index
      %23 = vector.load %arg6[%c0_16, %c0_17] : memref<8x128xf32, #tpu.memory_space<vmem>>, vector<8x128xf32>
      tpu.vector_store %arg6[%c0_16, %c0_17], %22 {strides = array<i32>} : memref<8x128xf32, #tpu.memory_space<vmem>>, vector<8x128xf32>,
    } else {
    }
    return
  }
  func.func @transform_0(%arg0: i32, %arg1: i32, %arg2: i32) -> (i32, i32) {
    %c0_i32 = arith.constant 0 : i32
    return %arg0, %arg2 : i32, i32
  }
  func.func @transform_1(%arg0: i32, %arg1: i32, %arg2: i32) -> (i32, i32) {
    %c0_i32 = arith.constant 0 : i32
    return %arg2, %arg1 : i32, i32
  }
  func.func @transform_2(%arg0: i32, %arg1: i32, %arg2: i32) -> (i32, i32) {
    %c0_i32 = arith.constant 0 : i32
    %c0_i32_0 = arith.constant 0 : i32
    return %c0_i32, %arg1 : i32, i32
  }
  func.func @transform_3(%arg0: i32, %arg1: i32, %arg2: i32) -> (i32, i32) {
    %c0_i32 = arith.constant 0 : i32
    return %arg0, %arg1 : i32, i32
  }
}

</mosaic_0001>

<llo_original>
// kernel: mlp_forward.1
$region0: #{mlp_forward.1}
  #allocation0 [shape = 'u32[]', space=smem, size = 0x4, offset = 0x4, fixed_abs, tag = 'smem constant byte address 0x4 - core index']
  #allocation1 [shape = 'u32[72,128]{1,0:T(1,128)}', space=vmem, size = 0x9000, scoped, tag = 'internal scratch']
  %s0 = inlined_call_operand.vmem [shape: f32[8,128], index: 0, kind: input, shape index: {}]
  %s1 = inlined_call_operand.hbm [shape: bf16[128,128], index: 1, kind: input, shape index: {}]
  %s2 = inlined_call_operand.vmem [shape: f32[1,128], index: 2, kind: input, shape index: {}]
  %s3 = inlined_call_operand.hbm [shape: f32[8,128], index: 3, kind: output, shape index: {}]
  %s4 = sld [smem:[#allocation0]]
  $region34: #{mlp_forward.1} parent=0
    _
  %s6 = ssub.s32 1, %s4
  %s7 = scalar_select 0, %s6, %s4
  $region1: #{mlp_forward.1} parent=0
    #allocation2 [shape = 'u8[32768]{0}', space=vmem, size = 0x8000, scoped, tag = 'input window, operand 1, single buffered']
    #allocation3 [shape = 's32[1]{0}', space=sflag, size = 0x4, scoped, tag = 'scoped memory for mlp_forward.1']
    #allocation4 [shape = 's32[1]{0}', space=sflag, size = 0x4, scoped, tag = 'scoped memory for mlp_forward.1']
    #allocation5 [shape = 'u8[4096]{0}', space=vmem, size = 0x1000, scoped, tag = 'output window, operand 0, single buffered']
    %8 = vsyncpa [#allocation3], 0
    %9 = vsyncpa [#allocation4], 0
    // Predicated region
    $region2: #{mlp_forward.1} parent=1 // pred_check
      _
    $region3: #{mlp_forward.1} parent=1 // pred_check_branch
      %11 = sbr.rel (0) target = $region5
    $region4: #{mlp_forward.1} parent=1 // pred_region
      _
    $region5: #{mlp_forward.1} parent=1 // pred_fallthru
      _
    // Predicated region
    $region6: #{mlp_forward.1} parent=1 // pred_check
      _
    $region7: #{mlp_forward.1} parent=1 // pred_check_branch
      %13 = sbr.rel (0) target = $region9
    $region8: #{mlp_forward.1} parent=1 // pred_region
      %15 = vsyncadd [#allocation3], 0
      %s16 = sshll.u32 %s1, 4
      %s17 = int_to_ptr.hbm [resolvable:$true] %s16
      %s18 = sshll.u32 [#allocation2], 4
      %s19 = int_to_ptr.vmem [resolvable:$true] %s18
      %24 = dma.hbm_to_vmem [thread:$0]  %s17, 1024, %s19, [#allocation3], 64, 64, 4
    $region9: #{mlp_forward.1} parent=1 // pred_fallthru
      _
    // Predicated region
    $region10: #{mlp_forward.1} parent=1 // pred_check
      _
    $region11: #{mlp_forward.1} parent=1 // pred_check_branch
      %26 = sbr.rel (0) target = $region13
    $region12: #{mlp_forward.1} parent=1 // pred_region
      _
    $region13: #{mlp_forward.1} parent=1 // pred_fallthru
      _
    // Predicated region
    $region14: #{mlp_forward.1} parent=1 // pred_check
      _
    $region15: #{mlp_forward.1} parent=1 // pred_check_branch
      %28 = sbr.rel (0) target = $region17
    $region16: #{mlp_forward.1} parent=1 // pred_region
      %30 = dma.done [#allocation3], 1024
    $region17: #{mlp_forward.1} parent=1 // pred_fallthru
      _
    %p31 = scmp.eq.s32.totalorder 0, 0
    // Predicated region
    $region18: #{mlp_forward.1} parent=1 // pred_check
      %p32 = pneg %p31
    $region19: #{mlp_forward.1} parent=1 // pred_check_branch
      %34 = sbr.rel (%p32) target = $region21
    $region20: #{mlp_forward.1} parent=1 // pred_region
      %35 = vst [vmem:[#allocation5] sm:$0xff] 0.0
    $region21: #{mlp_forward.1} parent=1 // pred_fallthru
      _
    %v36 = vld [vmem:[#allocation5] sm:$0xff]
    %v37 = vld [vmem:[%s0] sm:$0xff]
    %v38 = vpack.c.bf16 %v37, %v37
    %v39 = vld [vmem:[#allocation2] sm:$0xf]
    %v40 = vld [vmem:[#allocation2 + $0x4] sm:$0xf]
    %v41 = vld [vmem:[#allocation2 + $0x8] sm:$0xf]
    %v42 = vld [vmem:[#allocation2 + $0xc] sm:$0xf]
    %v43 = vld [vmem:[#allocation2 + $0x10] sm:$0xf]
    %v44 = vld [vmem:[#allocation2 + $0x14] sm:$0xf]
    %v45 = vld [vmem:[#allocation2 + $0x18] sm:$0xf]
    %v46 = vld [vmem:[#allocation2 + $0x1c] sm:$0xf]
    %v47 = vld [vmem:[#allocation2 + $0x20] sm:$0xf]
    %v48 = vld [vmem:[#allocation2 + $0x24] sm:$0xf]
    %v49 = vld [vmem:[#allocation2 + $0x28] sm:$0xf]
    %v50 = vld [vmem:[#allocation2 + $0x2c] sm:$0xf]
    %v51 = vld [vmem:[#allocation2 + $0x30] sm:$0xf]
    %v52 = vld [vmem:[#allocation2 + $0x34] sm:$0xf]
    %v53 = vld [vmem:[#allocation2 + $0x38] sm:$0xf]
    %v54 = vld [vmem:[#allocation2 + $0x3c] sm:$0xf]
    %v71 = vunpack.c.l.b16 %v39
    %v72 = vunpack.c.l.b16 %v40
    %v73 = vunpack.c.l.b16 %v41
    %v74 = vunpack.c.l.b16 %v42
    %v75 = vunpack.c.l.b16 %v43
    %v76 = vunpack.c.l.b16 %v44
    %v77 = vunpack.c.l.b16 %v45
    %v78 = vunpack.c.l.b16 %v46
    %v79 = vunpack.c.l.b16 %v47
    %v80 = vunpack.c.l.b16 %v48
    %v81 = vunpack.c.l.b16 %v49
    %v82 = vunpack.c.l.b16 %v50
    %v83 = vunpack.c.l.b16 %v51
    %v84 = vunpack.c.l.b16 %v52
    %v85 = vunpack.c.l.b16 %v53
    %v86 = vunpack.c.l.b16 %v54
    %v87 = vpack.c.b16 %v72, %v71
    %v88 = vpack.c.b16 %v74, %v73
    %v89 = vpack.c.b16 %v76, %v75
    %v90 = vpack.c.b16 %v78, %v77
    %v91 = vpack.c.b16 %v80, %v79
    %v92 = vpack.c.b16 %v82, %v81
    %v93 = vpack.c.b16 %v84, %v83
    %v94 = vpack.c.b16 %v86, %v85
    %103 = vmatpush.bf16.msra.mxu0 %v94
    %104 = vmatpush.bf16.msra.mxu0 %v93
    %105 = vmatpush.bf16.msra.mxu0 %v92
    %106 = vmatpush.bf16.msra.mxu0 %v91
    %107 = vmatpush.bf16.msra.mxu0 %v90
    %108 = vmatpush.bf16.msra.mxu0 %v89
    %109 = vmatpush.bf16.msra.mxu0 %v88
    %110 = vmatpush.bf16.msra.mxu0 %v87
    %111 = vmatmul.bf16.gmra.mxu0 %v38
    %v112 = vpop.f32.mrf.mxu0
    %v113 = vadd.f32 0.0, %v112
    %v114 = vpop.f32.mrf.mxu0
    %115 = vdwg.mxu0
    %v116 = vadd.f32 %v36, %v113
    %117 = vst [vmem:[#allocation5] sm:$0xff] %v116
    // Predicated region
    $region22: #{mlp_forward.1} parent=1 // pred_check
      %p118 = pneg %p31
    $region23: #{mlp_forward.1} parent=1 // pred_check_branch
      %120 = sbr.rel (%p118) target = $region25
    $region24: #{mlp_forward.1} parent=1 // pred_region
      %v121 = vld [vmem:[#allocation5] sm:$0xff]
      %v122 = vld [vmem:[%s2] sm:$0x1]
      %v124 = vperm.slane %v122, 0
      %v126 = vadd.f32 %v121, %v124
      %v127 = vsub.f32 0.0, %v126
      %v128 = vmul.f32 %v127, 1.442695
      %v129 = vpow.pop %v128
      %v130 = vadd.f32 %v129, 1.0
      %v131 = vrcp.pop %v130
      %132 = vst [vmem:[#allocation5] sm:$0xff] %v131
    $region25: #{mlp_forward.1} parent=1 // pred_fallthru
      _
    // Predicated region
    $region26: #{mlp_forward.1} parent=1 // pred_check
      _
    $region27: #{mlp_forward.1} parent=1 // pred_check_branch
      %134 = sbr.rel (0) target = $region29
    $region28: #{mlp_forward.1} parent=1 // pred_region
      %136 = vsyncadd [#allocation4], 0
      %s138 = sshll.u32 [#allocation5], 4
      %s139 = int_to_ptr.vmem [resolvable:$true] %s138
      %s140 = sshll.u32 %s3, 4
      %s141 = int_to_ptr.hbm [resolvable:$true] %s140
      %143 = dma.vmem_to_hbm [thread:$0]  %s139, 128, %s141, [#allocation4]
    $region29: #{mlp_forward.1} parent=1 // pred_fallthru
      _
    // Predicated region
    $region30: #{mlp_forward.1} parent=1 // pred_check
      _
    $region31: #{mlp_forward.1} parent=1 // pred_check_branch
      %145 = sbr.rel (0) target = $region33
    $region32: #{mlp_forward.1} parent=1 // pred_region
      %147 = dma.done [#allocation4], 128
    $region33: #{mlp_forward.1} parent=1 // pred_fallthru
      _
    %148 = vsyncpa [#allocation3], 1
    %149 = vsyncpa [#allocation4], 1

</llo_original>
